<compile_context>
chip_gen: v5e
topology: v5e:2x2
jax: 0.10.0
libtpu: 0.0.40
codegen_flags: <defaults>
</compile_context>

<pallas_src>
import jax
import jax.numpy as jnp
from jax import lax
from jax.experimental import pallas as pl
from jax.experimental.pallas import tpu as pltpu

B, S, VOCAB = 2, 8, 32       # small synthetic shapes
H1, H2 = 32, 32              # hidden sizes of the two synthetic backbones
NUM_LABELS = 2               # each sub-model emits 2 logits -> concat dim = 4
HCAT = H1 + H2               # 64 = fused hidden width

BPAD = 8                     # sublane-aligned batch pad
LANES = 128                  # lane-dense width

# bf16 weight-slab layout (all row offsets are multiples of 16 = bf16 sublane tile):
ROW_EMB = 0                  # rows [  0: 32): [emb1 | emb2]               in lanes 0:64
ROW_WH = 32                  # rows [ 32: 96): block-diag(w1h, w2h)        in lanes 0:64
ROW_WC = 96                  # rows [ 96:160): vstack(w1c@w3a, w2c@w3b)    in lanes 0:2
W_ROWS = 160

# f32 bias-slab layout (pre-replicated across 8 sublane rows):
ROW_BH = 0                   # rows [0: 8): [b1h | b2h]                    in lanes 0:64
ROW_BC = 8                   # rows [8:16): b1c@w3a + b2c@w3b + b3         in lanes 0:2
B_ROWS = 16


def classifier_kernel(ids_ref, w_ref, b_ref, out_ref):
    # --- embedding gather + mean-pool, expressed as one MXU matmul ----------
    # counts[b, v] = (1/S) * #{s : ids[b, s] == v}; rows >= B stay zero.
    lane = lax.broadcasted_iota(jnp.int32, (BPAD, LANES), 1)
    row = lax.broadcasted_iota(jnp.int32, (BPAD, LANES), 0)
    inv_s = jnp.float32(1.0 / S)
    counts = jnp.zeros((BPAD, LANES), jnp.float32)
    for b in range(B):                       # static unroll: B*S = 16 VPU select-adds
        row_hit = row == b
        for s in range(S):
            tok = ids_ref[b, s]              # scalar read from SMEM
            counts = counts + jnp.where(
                jnp.logical_and(row_hit, lane == tok), inv_s, 0.0)

    emb = w_ref[ROW_EMB:ROW_EMB + VOCAB, :]          # [32, 128] bf16
    wh = w_ref[ROW_WH:ROW_WH + HCAT, :]              # [64, 128] bf16
    wc = w_ref[ROW_WC:ROW_WC + HCAT, :]              # [64, 128] bf16
    bh = b_ref[ROW_BH:ROW_BH + BPAD, :]              # [8, 128] f32 (pre-replicated)
    bc = b_ref[ROW_BC:ROW_BC + BPAD, :]              # [8, 128] f32 (pre-replicated)

    # Gather + mean-pool of BOTH embedding tables in one bf16 MXU pass.
    pooled = jnp.dot(counts[:, :VOCAB].astype(jnp.bfloat16), emb,
                     preferred_element_type=jnp.float32)              # [8, 128] f32
    # Both synthetic hidden layers in one MXU pass (block-diagonal weights);
    # tanh + bias add stay f32 on the EUP/VPU.
    h = jnp.tanh(jnp.dot(pooled[:, :HCAT].astype(jnp.bfloat16), wh,
                         preferred_element_type=jnp.float32) + bh)    # [8, 128] f32
    # Head classifiers with out3 = Linear(4, 2) already folded in; dropout(0.3)
    # is the eval-mode identity so no masking is applied.
    out_ref[...] = jnp.dot(h[:, :HCAT].astype(jnp.bfloat16), wc,
                           preferred_element_type=jnp.float32) + bc   # [8, 128] f32


def init_params(key):
    ks = jax.random.split(key, 12)
    scale = 0.02
    return {
        "emb_table1": scale * jax.random.normal(ks[0], (VOCAB, H1), jnp.float32),
        "emb_table2": scale * jax.random.normal(ks[1], (VOCAB, H2), jnp.float32),
        # m1 head
        "w1h": scale * jax.random.normal(ks[2], (H1, H1), jnp.float32),
        "b1h": scale * jax.random.normal(ks[3], (1, H1), jnp.float32),
        "w1c": scale * jax.random.normal(ks[4], (H1, NUM_LABELS), jnp.float32),
        "b1c": scale * jax.random.normal(ks[5], (1, NUM_LABELS), jnp.float32),
        # m2 head
        "w2h": scale * jax.random.normal(ks[6], (H2, H2), jnp.float32),
        "b2h": scale * jax.random.normal(ks[7], (1, H2), jnp.float32),
        "w2c": scale * jax.random.normal(ks[8], (H2, NUM_LABELS), jnp.float32),
        "b2c": scale * jax.random.normal(ks[9], (1, NUM_LABELS), jnp.float32),
        # out3 = nn.Linear(4, 2)
        "w3": scale * jax.random.normal(ks[10], (2 * NUM_LABELS, NUM_LABELS), jnp.float32),
        "b3": scale * jax.random.normal(ks[11], (1, NUM_LABELS), jnp.float32),
    }


def pack_params(p):
    """One-time host-side fusion + packing:
       - bf16 [160, 128] weight slab: emb tables, block-diag hidden, fused classifier
       - f32  [ 16, 128] bias slab: bh / bc pre-replicated across 8 sublane rows."""
    # Concatenated embedding tables: one gather matmul serves both backbones.
    emb_cat = jnp.concatenate([p["emb_table1"], p["emb_table2"]], axis=1)     # [32, 64]

    # Block-diagonal fused hidden weight / concatenated hidden bias.
    wh_bd = jnp.block([[p["w1h"], jnp.zeros((H1, H2), jnp.float32)],
                       [jnp.zeros((H2, H1), jnp.float32), p["w2h"]]])         # [64, 64]
    bh = jnp.concatenate([p["b1h"], p["b2h"]], axis=1)                        # [1, 64]

    # Fold out3 = Linear(4, 2) into the two head classifiers.
    w3 = p["w3"]
    wc1 = p["w1c"] @ w3[:NUM_LABELS, :]                                       # [32, 2]
    wc2 = p["w2c"] @ w3[NUM_LABELS:, :]                                       # [32, 2]
    wc = jnp.concatenate([wc1, wc2], axis=0)                                  # [64, 2]
    bc = p["b1c"] @ w3[:NUM_LABELS, :] + p["b2c"] @ w3[NUM_LABELS:, :] + p["b3"]  # [1, 2]

    wslab = jnp.zeros((W_ROWS, LANES), jnp.float32)
    wslab = wslab.at[ROW_EMB:ROW_EMB + VOCAB, 0:HCAT].set(emb_cat)
    wslab = wslab.at[ROW_WH:ROW_WH + HCAT, 0:HCAT].set(wh_bd)
    wslab = wslab.at[ROW_WC:ROW_WC + HCAT, 0:NUM_LABELS].set(wc)
    wslab = wslab.astype(jnp.bfloat16)

    bias = jnp.zeros((B_ROWS, LANES), jnp.float32)
    bias = bias.at[ROW_BH:ROW_BH + BPAD, 0:HCAT].set(jnp.broadcast_to(bh, (BPAD, HCAT)))
    bias = bias.at[ROW_BC:ROW_BC + BPAD, 0:NUM_LABELS].set(
        jnp.broadcast_to(bc, (BPAD, NUM_LABELS)))
    return wslab, bias


def classifier_forward(ids, wslab, bias):
    smem = pl.BlockSpec(memory_space=pltpu.MemorySpace.SMEM)
    vmem = pl.BlockSpec(memory_space=pltpu.MemorySpace.VMEM)
    cost = pl.CostEstimate(
        flops=2 * BPAD * LANES * (VOCAB + HCAT + HCAT),
        transcendentals=BPAD * LANES,
        bytes_accessed=(W_ROWS * LANES * 2 + B_ROWS * LANES * 4
                        + B * S * 4 + BPAD * LANES * 4),
    )
    out_pad = pl.pallas_call(
        classifier_kernel,
        out_shape=jax.ShapeDtypeStruct((BPAD, LANES), jnp.float32),
        in_specs=[smem, vmem, vmem],
        out_specs=vmem,
        cost_estimate=cost,
    )(ids, wslab, bias)
    return out_pad[:B, :NUM_LABELS]


def reference_forward(ids, p):
    """Pure-JAX f32 reference of the un-fused synthetic model (for correctness)."""
    pooled1 = jnp.take(p["emb_table1"], ids, axis=0).mean(axis=1)
    h1 = jnp.tanh(pooled1 @ p["w1h"] + p["b1h"])
    logits1 = h1 @ p["w1c"] + p["b1c"]
    pooled2 = jnp.take(p["emb_table2"], ids, axis=0).mean(axis=1)
    h2 = jnp.tanh(pooled2 @ p["w2h"] + p["b2h"])
    logits2 = h2 @ p["w2c"] + p["b2c"]
    cat = jnp.concatenate([logits1, logits2], axis=1)   # dropout = identity (eval)
    return cat @ p["w3"] + p["b3"]


if __name__ == "__main__":
    key = jax.random.PRNGKey(0)
    k_ids, k_params = jax.random.split(key)

    ids = jax.random.randint(k_ids, (B, S), 0, VOCAB, dtype=jnp.int32)
    params = init_params(k_params)
    wslab, bias = pack_params(params)   # one-time host-side fusion/packing

    fwd = jax.jit(classifier_forward)
    out = jax.block_until_ready(fwd(ids, wslab, bias))

    assert out.shape == (B, NUM_LABELS) and out.dtype == jnp.float32
    ref = reference_forward(ids, params)
    # bf16 MXU operands (f32 accumulation / biases) -> relaxed tolerance.
    assert jnp.allclose(out, ref, rtol=2e-2, atol=2e-3), (out, ref)
    print("KERNEL_OK")
</pallas_src>

<mosaic_0001>
module attributes {stable_mosaic.version = 11 : i64} {
  func.func @classifier_kernel(%arg0: memref<2x8xi32, #tpu.memory_space<smem>>, %arg1: memref<160x128xbf16, #tpu.memory_space<vmem>>, %arg2: memref<16x128xf32, #tpu.memory_space<vmem>>, %arg3: memref<8x128xf32, #tpu.memory_space<vmem>>) attributes {dimension_semantics = [], scalar_prefetch = 0 : i64, scratch_operands = 0 : i64, tpu.core_type = #tpu.core_type<tc>} {
    %0 = tpu.iota {dimensions = array<i32: 1>} : vector<8x128xi32>
    %1 = tpu.iota {dimensions = array<i32: 0>} : vector<8x128xi32>
    %cst = arith.constant 0.000000e+00 : f32
    %2 = vector.broadcast %cst : f32 to vector<8x128xf32>
    %c0_i32 = arith.constant 0 : i32
    %3 = vector.broadcast %c0_i32 : i32 to vector<8x128xi32>
    %4 = arith.cmpi eq, %1, %3 : vector<8x128xi32>
    %c0 = arith.constant 0 : index
    %c0_0 = arith.constant 0 : index
    %5 = memref.load %arg0[%c0, %c0_0] : memref<2x8xi32, #tpu.memory_space<smem>>
    %6 = vector.broadcast %5 : i32 to vector<8x128xi32>
    %7 = arith.cmpi eq, %0, %6 : vector<8x128xi32>
    %8 = arith.andi %4, %7 : vector<8x128xi1>
    %cst_1 = arith.constant 1.250000e-01 : f32
    %cst_2 = arith.constant 0.000000e+00 : f32
    %9 = vector.broadcast %cst_1 : f32 to vector<8x128xf32>
    %10 = vector.broadcast %cst_2 : f32 to vector<8x128xf32>
    %11 = arith.select %8, %9, %10 : vector<8x128xi1>, vector<8x128xf32>
    %12 = arith.addf %2, %11 : vector<8x128xf32>
    %c0_3 = arith.constant 0 : index
    %c1 = arith.constant 1 : index
    %13 = memref.load %arg0[%c0_3, %c1] : memref<2x8xi32, #tpu.memory_space<smem>>
    %14 = vector.broadcast %13 : i32 to vector<8x128xi32>
    %15 = arith.cmpi eq, %0, %14 : vector<8x128xi32>
    %16 = arith.andi %4, %15 : vector<8x128xi1>
    %cst_4 = arith.constant 1.250000e-01 : f32
    %cst_5 = arith.constant 0.000000e+00 : f32
    %17 = vector.broadcast %cst_4 : f32 to vector<8x128xf32>
    %18 = vector.broadcast %cst_5 : f32 to vector<8x128xf32>
    %19 = arith.select %16, %17, %18 : vector<8x128xi1>, vector<8x128xf32>
    %20 = arith.addf %12, %19 : vector<8x128xf32>
    %c0_6 = arith.constant 0 : index
    %c2 = arith.constant 2 : index
    %21 = memref.load %arg0[%c0_6, %c2] : memref<2x8xi32, #tpu.memory_space<smem>>
    %22 = vector.broadcast %21 : i32 to vector<8x128xi32>
    %23 = arith.cmpi eq, %0, %22 : vector<8x128xi32>
    %24 = arith.andi %4, %23 : vector<8x128xi1>
    %cst_7 = arith.constant 1.250000e-01 : f32
    %cst_8 = arith.constant 0.000000e+00 : f32
    %25 = vector.broadcast %cst_7 : f32 to vector<8x128xf32>
    %26 = vector.broadcast %cst_8 : f32 to vector<8x128xf32>
    %27 = arith.select %24, %25, %26 : vector<8x128xi1>, vector<8x128xf32>
    %28 = arith.addf %20, %27 : vector<8x128xf32>
    %c0_9 = arith.constant 0 : index
    %c3 = arith.constant 3 : index
    %29 = memref.load %arg0[%c0_9, %c3] : memref<2x8xi32, #tpu.memory_space<smem>>
    %30 = vector.broadcast %29 : i32 to vector<8x128xi32>
    %31 = arith.cmpi eq, %0, %30 : vector<8x128xi32>
    %32 = arith.andi %4, %31 : vector<8x128xi1>
    %cst_10 = arith.constant 1.250000e-01 : f32
    %cst_11 = arith.constant 0.000000e+00 : f32
    %33 = vector.broadcast %cst_10 : f32 to vector<8x128xf32>
    %34 = vector.broadcast %cst_11 : f32 to vector<8x128xf32>
    %35 = arith.select %32, %33, %34 : vector<8x128xi1>, vector<8x128xf32>
    %36 = arith.addf %28, %35 : vector<8x128xf32>
    %c0_12 = arith.constant 0 : index
    %c4 = arith.constant 4 : index
    %37 = memref.load %arg0[%c0_12, %c4] : memref<2x8xi32, #tpu.memory_space<smem>>
    %38 = vector.broadcast %37 : i32 to vector<8x128xi32>
    %39 = arith.cmpi eq, %0, %38 : vector<8x128xi32>
    %40 = arith.andi %4, %39 : vector<8x128xi1>
    %cst_13 = arith.constant 1.250000e-01 : f32
    %cst_14 = arith.constant 0.000000e+00 : f32
    %41 = vector.broadcast %cst_13 : f32 to vector<8x128xf32>
    %42 = vector.broadcast %cst_14 : f32 to vector<8x128xf32>
    %43 = arith.select %40, %41, %42 : vector<8x128xi1>, vector<8x128xf32>
    %44 = arith.addf %36, %43 : vector<8x128xf32>
    %c0_15 = arith.constant 0 : index
    %c5 = arith.constant 5 : index
    %45 = memref.load %arg0[%c0_15, %c5] : memref<2x8xi32, #tpu.memory_space<smem>>
    %46 = vector.broadcast %45 : i32 to vector<8x128xi32>
    %47 = arith.cmpi eq, %0, %46 : vector<8x128xi32>
    %48 = arith.andi %4, %47 : vector<8x128xi1>
    %cst_16 = arith.constant 1.250000e-01 : f32
    %cst_17 = arith.constant 0.000000e+00 : f32
    %49 = vector.broadcast %cst_16 : f32 to vector<8x128xf32>
    %50 = vector.broadcast %cst_17 : f32 to vector<8x128xf32>
    %51 = arith.select %48, %49, %50 : vector<8x128xi1>, vector<8x128xf32>
    %52 = arith.addf %44, %51 : vector<8x128xf32>
    %c0_18 = arith.constant 0 : index
    %c6 = arith.constant 6 : index
    %53 = memref.load %arg0[%c0_18, %c6] : memref<2x8xi32, #tpu.memory_space<smem>>
    %54 = vector.broadcast %53 : i32 to vector<8x128xi32>
    %55 = arith.cmpi eq, %0, %54 : vector<8x128xi32>
    %56 = arith.andi %4, %55 : vector<8x128xi1>
    %cst_19 = arith.constant 1.250000e-01 : f32
    %cst_20 = arith.constant 0.000000e+00 : f32
    %57 = vector.broadcast %cst_19 : f32 to vector<8x128xf32>
    %58 = vector.broadcast %cst_20 : f32 to vector<8x128xf32>
    %59 = arith.select %56, %57, %58 : vector<8x128xi1>, vector<8x128xf32>
    %60 = arith.addf %52, %59 : vector<8x128xf32>
    %c0_21 = arith.constant 0 : index
    %c7 = arith.constant 7 : index
    %61 = memref.load %arg0[%c0_21, %c7] : memref<2x8xi32, #tpu.memory_space<smem>>
    %62 = vector.broadcast %61 : i32 to vector<8x128xi32>
    %63 = arith.cmpi eq, %0, %62 : vector<8x128xi32>
    %64 = arith.andi %4, %63 : vector<8x128xi1>
    %cst_22 = arith.constant 1.250000e-01 : f32
    %cst_23 = arith.constant 0.000000e+00 : f32
    %65 = vector.broadcast %cst_22 : f32 to vector<8x128xf32>
    %66 = vector.broadcast %cst_23 : f32 to vector<8x128xf32>
    %67 = arith.select %64, %65, %66 : vector<8x128xi1>, vector<8x128xf32>
    %68 = arith.addf %60, %67 : vector<8x128xf32>
    %c1_i32 = arith.constant 1 : i32
    %69 = vector.broadcast %c1_i32 : i32 to vector<8x128xi32>
    %70 = arith.cmpi eq, %1, %69 : vector<8x128xi32>
    %c1_24 = arith.constant 1 : index
    %c0_25 = arith.constant 0 : index
    %71 = memref.load %arg0[%c1_24, %c0_25] : memref<2x8xi32, #tpu.memory_space<smem>>
    %72 = vector.broadcast %71 : i32 to vector<8x128xi32>
    %73 = arith.cmpi eq, %0, %72 : vector<8x128xi32>
    %74 = arith.andi %70, %73 : vector<8x128xi1>
    %cst_26 = arith.constant 1.250000e-01 : f32
    %cst_27 = arith.constant 0.000000e+00 : f32
    %75 = vector.broadcast %cst_26 : f32 to vector<8x128xf32>
    %76 = vector.broadcast %cst_27 : f32 to vector<8x128xf32>
    %77 = arith.select %74, %75, %76 : vector<8x128xi1>, vector<8x128xf32>
    %78 = arith.addf %68, %77 : vector<8x128xf32>
    %c1_28 = arith.constant 1 : index
    %c1_29 = arith.constant 1 : index
    %79 = memref.load %arg0[%c1_28, %c1_29] : memref<2x8xi32, #tpu.memory_space<smem>>
    %80 = vector.broadcast %79 : i32 to vector<8x128xi32>
    %81 = arith.cmpi eq, %0, %80 : vector<8x128xi32>
    %82 = arith.andi %70, %81 : vector<8x128xi1>
    %cst_30 = arith.constant 1.250000e-01 : f32
    %cst_31 = arith.constant 0.000000e+00 : f32
    %83 = vector.broadcast %cst_30 : f32 to vector<8x128xf32>
    %84 = vector.broadcast %cst_31 : f32 to vector<8x128xf32>
    %85 = arith.select %82, %83, %84 : vector<8x128xi1>, vector<8x128xf32>
    %86 = arith.addf %78, %85 : vector<8x128xf32>
    %c1_32 = arith.constant 1 : index
    %c2_33 = arith.constant 2 : index
    %87 = memref.load %arg0[%c1_32, %c2_33] : memref<2x8xi32, #tpu.memory_space<smem>>
    %88 = vector.broadcast %87 : i32 to vector<8x128xi32>
    %89 = arith.cmpi eq, %0, %88 : vector<8x128xi32>
    %90 = arith.andi %70, %89 : vector<8x128xi1>
    %cst_34 = arith.constant 1.250000e-01 : f32
    %cst_35 = arith.constant 0.000000e+00 : f32
    %91 = vector.broadcast %cst_34 : f32 to vector<8x128xf32>
    %92 = vector.broadcast %cst_35 : f32 to vector<8x128xf32>
    %93 = arith.select %90, %91, %92 : vector<8x128xi1>, vector<8x128xf32>
    %94 = arith.addf %86, %93 : vector<8x128xf32>
    %c1_36 = arith.constant 1 : index
    %c3_37 = arith.constant 3 : index
    %95 = memref.load %arg0[%c1_36, %c3_37] : memref<2x8xi32, #tpu.memory_space<smem>>
    %96 = vector.broadcast %95 : i32 to vector<8x128xi32>
    %97 = arith.cmpi eq, %0, %96 : vector<8x128xi32>
    %98 = arith.andi %70, %97 : vector<8x128xi1>
    %cst_38 = arith.constant 1.250000e-01 : f32
    %cst_39 = arith.constant 0.000000e+00 : f32
    %99 = vector.broadcast %cst_38 : f32 to vector<8x128xf32>
    %100 = vector.broadcast %cst_39 : f32 to vector<8x128xf32>
    %101 = arith.select %98, %99, %100 : vector<8x128xi1>, vector<8x128xf32>
    %102 = arith.addf %94, %101 : vector<8x128xf32>
    %c1_40 = arith.constant 1 : index
    %c4_41 = arith.constant 4 : index
    %103 = memref.load %arg0[%c1_40, %c4_41] : memref<2x8xi32, #tpu.memory_space<smem>>
    %104 = vector.broadcast %103 : i32 to vector<8x128xi32>
    %105 = arith.cmpi eq, %0, %104 : vector<8x128xi32>
    %106 = arith.andi %70, %105 : vector<8x128xi1>
    %cst_42 = arith.constant 1.250000e-01 : f32
    %cst_43 = arith.constant 0.000000e+00 : f32
    %107 = vector.broadcast %cst_42 : f32 to vector<8x128xf32>
    %108 = vector.broadcast %cst_43 : f32 to vector<8x128xf32>
    %109 = arith.select %106, %107, %108 : vector<8x128xi1>, vector<8x128xf32>
    %110 = arith.addf %102, %109 : vector<8x128xf32>
    %c1_44 = arith.constant 1 : index
    %c5_45 = arith.constant 5 : index
    %111 = memref.load %arg0[%c1_44, %c5_45] : memref<2x8xi32, #tpu.memory_space<smem>>
    %112 = vector.broadcast %111 : i32 to vector<8x128xi32>
    %113 = arith.cmpi eq, %0, %112 : vector<8x128xi32>
    %114 = arith.andi %70, %113 : vector<8x128xi1>
    %cst_46 = arith.constant 1.250000e-01 : f32
    %cst_47 = arith.constant 0.000000e+00 : f32
    %115 = vector.broadcast %cst_46 : f32 to vector<8x128xf32>
    %116 = vector.broadcast %cst_47 : f32 to vector<8x128xf32>
    %117 = arith.select %114, %115, %116 : vector<8x128xi1>, vector<8x128xf32>
    %118 = arith.addf %110, %117 : vector<8x128xf32>
    %c1_48 = arith.constant 1 : index
    %c6_49 = arith.constant 6 : index
    %119 = memref.load %arg0[%c1_48, %c6_49] : memref<2x8xi32, #tpu.memory_space<smem>>
    %120 = vector.broadcast %119 : i32 to vector<8x128xi32>
    %121 = arith.cmpi eq, %0, %120 : vector<8x128xi32>
    %122 = arith.andi %70, %121 : vector<8x128xi1>
    %cst_50 = arith.constant 1.250000e-01 : f32
    %cst_51 = arith.constant 0.000000e+00 : f32
    %123 = vector.broadcast %cst_50 : f32 to vector<8x128xf32>
    %124 = vector.broadcast %cst_51 : f32 to vector<8x128xf32>
    %125 = arith.select %122, %123, %124 : vector<8x128xi1>, vector<8x128xf32>
    %126 = arith.addf %118, %125 : vector<8x128xf32>
    %c1_52 = arith.constant 1 : index
    %c7_53 = arith.constant 7 : index
    %127 = memref.load %arg0[%c1_52, %c7_53] : memref<2x8xi32, #tpu.memory_space<smem>>
    %128 = vector.broadcast %127 : i32 to vector<8x128xi32>
    %129 = arith.cmpi eq, %0, %128 : vector<8x128xi32>
    %130 = arith.andi %70, %129 : vector<8x128xi1>
    %cst_54 = arith.constant 1.250000e-01 : f32
    %cst_55 = arith.constant 0.000000e+00 : f32
    %131 = vector.broadcast %cst_54 : f32 to vector<8x128xf32>
    %132 = vector.broadcast %cst_55 : f32 to vector<8x128xf32>
    %133 = arith.select %130, %131, %132 : vector<8x128xi1>, vector<8x128xf32>
    %134 = arith.addf %126, %133 : vector<8x128xf32>
    %c0_56 = arith.constant 0 : index
    %c0_57 = arith.constant 0 : index
    %135 = vector.load %arg1[%c0_56, %c0_57] : memref<160x128xbf16, #tpu.memory_space<vmem>>, vector<32x128xbf16>
    %c32 = arith.constant 32 : index
    %c0_58 = arith.constant 0 : index
    %136 = vector.load %arg1[%c32, %c0_58] : memref<160x128xbf16, #tpu.memory_space<vmem>>, vector<64x128xbf16>
    %c96 = arith.constant 96 : index
    %c0_59 = arith.constant 0 : index
    %137 = vector.load %arg1[%c96, %c0_59] : memref<160x128xbf16, #tpu.memory_space<vmem>>, vector<64x128xbf16>
    %c0_60 = arith.constant 0 : index
    %c0_61 = arith.constant 0 : index
    %138 = vector.load %arg2[%c0_60, %c0_61] : memref<16x128xf32, #tpu.memory_space<vmem>>, vector<8x128xf32>
    %c8 = arith.constant 8 : index
    %c0_62 = arith.constant 0 : index
    %139 = vector.load %arg2[%c8, %c0_62] : memref<16x128xf32, #tpu.memory_space<vmem>>, vector<8x128xf32>
    %140 = vector.extract_strided_slice %134 {offsets = [0, 0], sizes = [8, 32], strides = [1, 1]} : vector<8x128xf32> to vector<8x32xf32>
    %141 = arith.truncf %140 : vector<8x32xf32> to vector<8x32xbf16>
    %cst_63 = arith.constant dense<0.000000e+00> : vector<8x128xf32>
    %142 = tpu.matmul %141, %135, %cst_63 {dimension_numbers = #tpu.dot_dimension_numbers<[1], [0], [0], [1], [0, 0, 1, 1], [], []>} : vector<8x32xbf16>, vector<32x128xbf16>, vector<8x128xf32> -> vector<8x128xf32>
    %143 = vector.extract_strided_slice %142 {offsets = [0, 0], sizes = [8, 64], strides = [1, 1]} : vector<8x128xf32> to vector<8x64xf32>
    %144 = arith.truncf %143 : vector<8x64xf32> to vector<8x64xbf16>
    %cst_64 = arith.constant dense<0.000000e+00> : vector<8x128xf32>
    %145 = tpu.matmul %144, %136, %cst_64 {dimension_numbers = #tpu.dot_dimension_numbers<[1], [0], [0], [1], [0, 0, 1, 1], [], []>} : vector<8x64xbf16>, vector<64x128xbf16>, vector<8x128xf32> -> vector<8x128xf32>
    %146 = arith.addf %145, %138 : vector<8x128xf32>
    %147 = math.tanh %146 : vector<8x128xf32>
    %148 = vector.extract_strided_slice %147 {offsets = [0, 0], sizes = [8, 64], strides = [1, 1]} : vector<8x128xf32> to vector<8x64xf32>
    %149 = arith.truncf %148 : vector<8x64xf32> to vector<8x64xbf16>
    %cst_65 = arith.constant dense<0.000000e+00> : vector<8x128xf32>
    %150 = tpu.matmul %149, %137, %cst_65 {dimension_numbers = #tpu.dot_dimension_numbers<[1], [0], [0], [1], [0, 0, 1, 1], [], []>} : vector<8x64xbf16>, vector<64x128xbf16>, vector<8x128xf32> -> vector<8x128xf32>
    %151 = arith.addf %150, %139 : vector<8x128xf32>
    %c0_66 = arith.constant 0 : index
    %c0_67 = arith.constant 0 : index
    %152 = vector.load %arg3[%c0_66, %c0_67] : memref<8x128xf32, #tpu.memory_space<vmem>>, vector<8x128xf32>
    tpu.vector_store %arg3[%c0_66, %c0_67], %151 {strides = array<i32>} : memref<8x128xf32, #tpu.memory_space<vmem>>, vector<8x128xf32>,
    return
  }
}

</mosaic_0001>

<llo_original>
// kernel: classifier_forward.1
$region0: #{classifier_forward.1}
  #allocation0 [shape = 'u32[]', space=smem, size = 0x4, offset = 0x4, fixed_abs, tag = 'smem constant byte address 0x4 - core index']
  #allocation1 [shape = 'u32[72,128]{1,0:T(1,128)}', space=vmem, size = 0x9000, scoped, tag = 'internal scratch']
  %s0 = inlined_call_operand.hbm [shape: s32[2,8], index: 0, kind: input, shape index: {}]
  %s1 = inlined_call_operand.hbm [shape: bf16[160,128], index: 1, kind: input, shape index: {}]
  %s2 = inlined_call_operand.hbm [shape: f32[16,128], index: 2, kind: input, shape index: {}]
  %s3 = inlined_call_operand.vmem [shape: f32[8,128], index: 3, kind: output, shape index: {}]
  %s4 = sld [smem:[#allocation0]]
  $region34: #{classifier_forward.1} parent=0
    _
  %s6 = ssub.s32 1, %s4
  %s7 = scalar_select 0, %s6, %s4
  $region1: #{classifier_forward.1} parent=0
    #allocation2 [shape = 'u8[1024]{0}', space=smem, size = 0x400, scoped, tag = 'input window, operand 0, single buffered']
    #allocation3 [shape = 's32[1]{0}', space=sflag, size = 0x4, scoped, tag = 'scoped memory for classifier_forward.1']
    #allocation4 [shape = 's32[1]{0}', space=sflag, size = 0x4, scoped, tag = 'scoped memory for classifier_forward.1']
    #allocation5 [shape = 'u8[40960]{0}', space=vmem, size = 0xa000, scoped, tag = 'input window, operand 1, single buffered']
    #allocation6 [shape = 'u8[8192]{0}', space=vmem, size = 0x2000, scoped, tag = 'input window, operand 2, single buffered']
    #allocation7 [shape = 's32[1]{0}', space=sflag, size = 0x4, scoped, tag = 'scoped memory for classifier_forward.1']
    %8 = vsyncpa [#allocation4], 0
    %9 = vsyncpa [#allocation3], 0
    %10 = vsyncpa [#allocation7], 0
    // Predicated region
    $region2: #{classifier_forward.1} parent=1 // pred_check
      _
    $region3: #{classifier_forward.1} parent=1 // pred_check_branch
      %12 = sbr.rel (0) target = $region5
    $region4: #{classifier_forward.1} parent=1 // pred_region
      %14 = vsyncadd [#allocation4], 0
      %s16 = sshll.u32 %s0, 4
      %s17 = int_to_ptr.hbm [resolvable:$true] %s16
      %19 = dma.hbm_to_smem %s17, 32, [#allocation2], [#allocation4]
    $region5: #{classifier_forward.1} parent=1 // pred_fallthru
      _
    // Predicated region
    $region6: #{classifier_forward.1} parent=1 // pred_check
      _
    $region7: #{classifier_forward.1} parent=1 // pred_check_branch
      %21 = sbr.rel (0) target = $region9
    $region8: #{classifier_forward.1} parent=1 // pred_region
      %23 = vsyncadd [#allocation3], 0
      %s24 = sshll.u32 %s1, 4
      %s25 = int_to_ptr.hbm [resolvable:$true] %s24
      %s26 = sshll.u32 [#allocation5], 4
      %s27 = int_to_ptr.vmem [resolvable:$true] %s26
      %32 = dma.hbm_to_vmem [thread:$0]  %s25, 1280, %s27, [#allocation3], 64, 64, 4
    $region9: #{classifier_forward.1} parent=1 // pred_fallthru
      _
    // Predicated region
    $region10: #{classifier_forward.1} parent=1 // pred_check
      _
    $region11: #{classifier_forward.1} parent=1 // pred_check_branch
      %34 = sbr.rel (0) target = $region13
    $region12: #{classifier_forward.1} parent=1 // pred_region
      %36 = vsyncadd [#allocation7], 0
      %s37 = sshll.u32 %s2, 4
      %s38 = int_to_ptr.hbm [resolvable:$true] %s37
      %s39 = sshll.u32 [#allocation6], 4
      %s40 = int_to_ptr.vmem [resolvable:$true] %s39
      %45 = dma.hbm_to_vmem [thread:$0]  %s38, 256, %s40, [#allocation7], 128, 128, 8
    $region13: #{classifier_forward.1} parent=1 // pred_fallthru
      _
    // Predicated region
    $region14: #{classifier_forward.1} parent=1 // pred_check
      _
    $region15: #{classifier_forward.1} parent=1 // pred_check_branch
      %47 = sbr.rel (0) target = $region17
    $region16: #{classifier_forward.1} parent=1 // pred_region
      %49 = dma.done [#allocation4], 32
    $region17: #{classifier_forward.1} parent=1 // pred_fallthru
      _
    // Predicated region
    $region18: #{classifier_forward.1} parent=1 // pred_check
      _
    $region19: #{classifier_forward.1} parent=1 // pred_check_branch
      %51 = sbr.rel (0) target = $region21
    $region20: #{classifier_forward.1} parent=1 // pred_region
      %53 = dma.done [#allocation3], 1280
    $region21: #{classifier_forward.1} parent=1 // pred_fallthru
      _
    // Predicated region
    $region22: #{classifier_forward.1} parent=1 // pred_check
      _
    $region23: #{classifier_forward.1} parent=1 // pred_check_branch
      %55 = sbr.rel (0) target = $region25
    $region24: #{classifier_forward.1} parent=1 // pred_region
      %57 = dma.done [#allocation7], 256
    $region25: #{classifier_forward.1} parent=1 // pred_fallthru
      _
    %58 = sfence
    %v60 = vlaneseq
    %v61 = vand.u32 %v60, 127
    %v62 = vlaneseq
    %v63 = vshrl.u32 %v62, 7
    %vm64 = vcmp.eq.s32.totalorder %v63, 0
    %s65 = sld [smem:[#allocation2]]
    %v66 = vstv %s65
    %vm67 = vcmp.eq.s32.totalorder %v61, %v66
    %vm68 = vmand %vm64, %vm67
    %v69 = vsel %vm68, 0.125, 0.0
    %v70 = vadd.f32 %v69, 0.0
    %s71 = sld [smem:[#allocation2 + $0x1]]
    %v72 = vstv %s71
    %vm73 = vcmp.eq.s32.totalorder %v61, %v72
    %vm74 = vmand %vm64, %vm73
    %v75 = vsel %vm74, 0.125, 0.0
    %v76 = vadd.f32 %v70, %v75
    %s77 = sld [smem:[#allocation2 + $0x2]]
    %v78 = vstv %s77
    %vm79 = vcmp.eq.s32.totalorder %v61, %v78
    %vm80 = vmand %vm64, %vm79
    %v81 = vsel %vm80, 0.125, 0.0
    %v82 = vadd.f32 %v76, %v81
    %s83 = sld [smem:[#allocation2 + $0x3]]
    %v84 = vstv %s83
    %vm85 = vcmp.eq.s32.totalorder %v61, %v84
    %vm86 = vmand %vm64, %vm85
    %v87 = vsel %vm86, 0.125, 0.0
    %v88 = vadd.f32 %v82, %v87
    %s89 = sld [smem:[#allocation2 + $0x4]]
    %v90 = vstv %s89
    %vm91 = vcmp.eq.s32.totalorder %v61, %v90
    %vm92 = vmand %vm64, %vm91
    %v93 = vsel %vm92, 0.125, 0.0
    %v94 = vadd.f32 %v88, %v93
    %s95 = sld [smem:[#allocation2 + $0x5]]
    %v96 = vstv %s95
    %vm97 = vcmp.eq.s32.totalorder %v61, %v96
    %vm98 = vmand %vm64, %vm97
    %v99 = vsel %vm98, 0.125, 0.0
    %v100 = vadd.f32 %v94, %v99
    %s101 = sld [smem:[#allocation2 + $0x6]]
    %v102 = vstv %s101
    %vm103 = vcmp.eq.s32.totalorder %v61, %v102
    %vm104 = vmand %vm64, %vm103
    %v105 = vsel %vm104, 0.125, 0.0
    %v106 = vadd.f32 %v100, %v105
    %s107 = sld [smem:[#allocation2 + $0x7]]
    %v108 = vstv %s107
    %vm109 = vcmp.eq.s32.totalorder %v61, %v108
    %vm110 = vmand %vm64, %vm109
    %v111 = vsel %vm110, 0.125, 0.0
    %v112 = vadd.f32 %v106, %v111
    %vm113 = vcmp.eq.s32.totalorder %v63, 1
    %s114 = sld [smem:[#allocation2 + $0x80]]
    %v115 = vstv %s114
    %vm116 = vcmp.eq.s32.totalorder %v61, %v115
    %vm117 = vmand %vm113, %vm116
    %v118 = vsel %vm117, 0.125, 0.0
    %v119 = vadd.f32 %v112, %v118
    %s120 = sld [smem:[#allocation2 + $0x81]]
    %v121 = vstv %s120
    %vm122 = vcmp.eq.s32.totalorder %v61, %v121
    %vm123 = vmand %vm113, %vm122
    %v124 = vsel %vm123, 0.125, 0.0
    %v125 = vadd.f32 %v119, %v124
    %s126 = sld [smem:[#allocation2 + $0x82]]
    %v127 = vstv %s126
    %vm128 = vcmp.eq.s32.totalorder %v61, %v127
    %vm129 = vmand %vm113, %vm128
    %v130 = vsel %vm129, 0.125, 0.0
    %v131 = vadd.f32 %v125, %v130
    %s132 = sld [smem:[#allocation2 + $0x83]]
    %v133 = vstv %s132
    %vm134 = vcmp.eq.s32.totalorder %v61, %v133
    %vm135 = vmand %vm113, %vm134
    %v136 = vsel %vm135, 0.125, 0.0
    %v137 = vadd.f32 %v131, %v136
    %s138 = sld [smem:[#allocation2 + $0x84]]
    %v139 = vstv %s138
    %vm140 = vcmp.eq.s32.totalorder %v61, %v139
    %vm141 = vmand %vm113, %vm140
    %v142 = vsel %vm141, 0.125, 0.0
    %v143 = vadd.f32 %v137, %v142
    %s144 = sld [smem:[#allocation2 + $0x85]]
    %v145 = vstv %s144
    %vm146 = vcmp.eq.s32.totalorder %v61, %v145
    %vm147 = vmand %vm113, %vm146
    %v148 = vsel %vm147, 0.125, 0.0
    %v149 = vadd.f32 %v143, %v148
    %s150 = sld [smem:[#allocation2 + $0x86]]
    %v151 = vstv %s150
    %vm152 = vcmp.eq.s32.totalorder %v61, %v151
    %vm153 = vmand %vm113, %vm152
    %v154 = vsel %vm153, 0.125, 0.0
    %v155 = vadd.f32 %v149, %v154
    %s156 = sld [smem:[#allocation2 + $0x87]]
    %v157 = vstv %s156
    %vm158 = vcmp.eq.s32.totalorder %v61, %v157
    %vm159 = vmand %vm113, %vm158
    %v160 = vsel %vm159, 0.125, 0.0
    %v161 = vadd.f32 %v155, %v160
    %v162 = vld [vmem:[#allocation5] sm:$0xf]
    %v163 = vld [vmem:[#allocation5 + $0x4] sm:$0xf]
    %v164 = vld [vmem:[#allocation5 + $0x8] sm:$0xf]
    %v165 = vld [vmem:[#allocation5 + $0xc] sm:$0xf]
    %v166 = vld [vmem:[#allocation5 + $0x10] sm:$0xf]
    %v167 = vld [vmem:[#allocation5 + $0x14] sm:$0xf]
    %v168 = vld [vmem:[#allocation5 + $0x18] sm:$0xf]
    %v169 = vld [vmem:[#allocation5 + $0x1c] sm:$0xf]
    %v170 = vld [vmem:[#allocation5 + $0x20] sm:$0xf]
    %v171 = vld [vmem:[#allocation5 + $0x24] sm:$0xf]
    %v172 = vld [vmem:[#allocation5 + $0x28] sm:$0xf]
    %v173 = vld [vmem:[#allocation5 + $0x2c] sm:$0xf]
    %v174 = vld [vmem:[#allocation5 + $0x30] sm:$0xf]
    %v175 = vld [vmem:[#allocation5 + $0x34] sm:$0xf]
    %v176 = vld [vmem:[#allocation5 + $0x38] sm:$0xf]
    %v177 = vld [vmem:[#allocation5 + $0x3c] sm:$0xf]
    %v178 = vld [vmem:[#allocation5 + $0x40] sm:$0xf]
    %v179 = vld [vmem:[#allocation5 + $0x44] sm:$0xf]
    %v180 = vld [vmem:[#allocation5 + $0x48] sm:$0xf]
    %v181 = vld [vmem:[#allocation5 + $0x4c] sm:$0xf]
    %v182 = vld [vmem:[#allocation6] sm:$0xff]
    %v183 = vld [vmem:[#allocation6 + $0x8] sm:$0xff]
    %v184 = vpack.c.bf16 %v161, %v161
    %v189 = vunpack.c.l.b16 %v162
    %v190 = vunpack.c.l.b16 %v163
    %v191 = vunpack.c.l.b16 %v164
    %v192 = vunpack.c.l.b16 %v165
    %v193 = vpack.c.b16 %v190, %v189
    %v194 = vpack.c.b16 %v192, %v191
    %vm197 = vcmask 261120
    %v199 = vsel %vm197, %v184, 0
    %201 = vmatpush.bf16.msra.mxu0 0
    %202 = vmatpush.bf16.msra.mxu0 0
    %203 = vmatpush.bf16.msra.mxu0 0
    %204 = vmatpush.bf16.msra.mxu0 0
    %205 = vmatpush.bf16.msra.mxu0 0
    %206 = vmatpush.bf16.msra.mxu0 0
    %207 = vmatpush.bf16.msra.mxu0 %v194
    %208 = vmatpush.bf16.msra.mxu0 %v193
    %209 = vmatmul.bf16.gmra.mxu0 %v199
    %v210 = vpop.f32.mrf.mxu0
    %v211 = vadd.f32 0.0, %v210
    %v212 = vpop.f32.mrf.mxu0
    %213 = vdwg.mxu0
    %v214 = vpack.c.bf16 %v211, %v211
    %v223 = vunpack.c.l.b16 %v166
    %v224 = vunpack.c.l.b16 %v167
    %v225 = vunpack.c.l.b16 %v168
    %v226 = vunpack.c.l.b16 %v169
    %v227 = vunpack.c.l.b16 %v170
    %v228 = vunpack.c.l.b16 %v171
    %v229 = vunpack.c.l.b16 %v172
    %v230 = vunpack.c.l.b16 %v173
    %v231 = vpack.c.b16 %v224, %v223
    %v232 = vpack.c.b16 %v226, %v225
    %v233 = vpack.c.b16 %v228, %v227
    %v234 = vpack.c.b16 %v230, %v229
    %vm239 = vcmask 523264
    %v241 = vsel %vm239, %v214, 0
    %243 = vmatpush.bf16.msra.mxu0 0
    %244 = vmatpush.bf16.msra.mxu0 0
    %245 = vmatpush.bf16.msra.mxu0 0
    %246 = vmatpush.bf16.msra.mxu0 0
    %247 = vmatpush.bf16.msra.mxu0 %v234
    %248 = vmatpush.bf16.msra.mxu0 %v233
    %249 = vmatpush.bf16.msra.mxu0 %v232
    %250 = vmatpush.bf16.msra.mxu0 %v231
    %251 = vmatmul.bf16.gmra.mxu0 %v241
    %v252 = vpop.f32.mrf.mxu0
    %v253 = vadd.f32 %v182, %v252
    %v254 = vpop.f32.mrf.mxu0
    %255 = vdwg.mxu0
    %v256 = vtanh.pop %v253
    %v257 = vpack.c.bf16 %v256, %v256
    %v266 = vunpack.c.l.b16 %v174
    %v267 = vunpack.c.l.b16 %v175
    %v268 = vunpack.c.l.b16 %v176
    %v269 = vunpack.c.l.b16 %v177
    %v270 = vunpack.c.l.b16 %v178
    %v271 = vunpack.c.l.b16 %v179
    %v272 = vunpack.c.l.b16 %v180
    %v273 = vunpack.c.l.b16 %v181
    %v274 = vpack.c.b16 %v267, %v266
    %v275 = vpack.c.b16 %v269, %v268
    %v276 = vpack.c.b16 %v271, %v270
    %v277 = vpack.c.b16 %v273, %v272
    %v283 = vsel %vm239, %v257, 0
    %285 = vmatpush.bf16.msra.mxu0 0
    %286 = vmatpush.bf16.msra.mxu0 0
    %287 = vmatpush.bf16.msra.mxu0 0
    %288 = vmatpush.bf16.msra.mxu0 0
    %289 = vmatpush.bf16.msra.mxu0 %v277
    %290 = vmatpush.bf16.msra.mxu0 %v276
    %291 = vmatpush.bf16.msra.mxu0 %v275
    %292 = vmatpush.bf16.msra.mxu0 %v274
    %293 = vmatmul.bf16.gmra.mxu0 %v283
    %v294 = vpop.f32.mrf.mxu0
    %v295 = vadd.f32 %v183, %v294
    %v296 = vpop.f32.mrf.mxu0
    %297 = vdwg.mxu0
    %298 = vst [vmem:[%s3] sm:$0xff] %v295
    // Predicated region
    $region26: #{classifier_forward.1} parent=1 // pred_check
      _
    $region27: #{classifier_forward.1} parent=1 // pred_check_branch
      %300 = sbr.rel (0) target = $region29
    $region28: #{classifier_forward.1} parent=1 // pred_region
      _
    $region29: #{classifier_forward.1} parent=1 // pred_fallthru
      _
    // Predicated region
    $region30: #{classifier_forward.1} parent=1 // pred_check
      _
    $region31: #{classifier_forward.1} parent=1 // pred_check_branch
      %302 = sbr.rel (0) target = $region33
    $region32: #{classifier_forward.1} parent=1 // pred_region
      _
    $region33: #{classifier_forward.1} parent=1 // pred_fallthru
      _
    %303 = vsyncpa [#allocation3], 1
    %304 = vsyncpa [#allocation7], 1
    %305 = vsyncpa [#allocation4], 1

</llo_original>
